<compile_context>
chip_gen: v7x
topology: tpu7x:2x2x1
jax: 0.10.0
libtpu: 0.0.40
codegen_flags: <defaults>
</compile_context>

<pallas_src>
import jax
import jax.numpy as jnp
from jax.experimental import pallas as pl
from jax.experimental.pallas import tpu as pltpu

CLAMP = 2.0  # self.clamp
LANE = 128


def _coupling_kernel(x_ref, w2_ref, b2_ref, w1_ref, b1_ref, y_ref, jac_ref):
    """GLOW-style affine coupling on channel-major (C, R, 128) planes.

    x_ref : VMEM (C, R, 128)          input, channel-major lane-dense planes
    w*_ref, b*_ref : SMEM 1-D f32     tiny 1x1-conv subnet params, [o*cin + k]
    y_ref : VMEM (C, R, 128)          output planes
    jac_ref : SMEM (B,) f32           per-sample log-det
    """
    C, R, _ = x_ref.shape
    c1 = C // 2            # split_len1
    c2 = C - c1            # split_len2
    B = jac_ref.shape[0]
    rpb = R // B           # rows per sample (= HW // 128)

    # Each channel is a dense (R, 128) plane sliced on the leading axis.
    x1 = [x_ref[k].astype(jnp.float32) for k in range(c1)]
    x2 = [x_ref[c1 + k].astype(jnp.float32) for k in range(c2)]

    def subnet(u, w_ref, b_ref, cin, cout):
        # 1x1 conv: out[o] = b[o] + sum_k w[o, k] * u[k]
        # Unrolled: SMEM scalar reads ride the scalar slot and splat into
        # vregs; the FMAs are plain full-vreg VPU work.
        outs = []
        for o in range(cout):
            acc = u[0] * w_ref[o * cin + 0]
            for k in range(1, cin):
                acc = acc + u[k] * w_ref[o * cin + k]
            outs.append(acc + b_ref[o])
        return outs

    # ---- _coupling1: affine-transform x1 conditioned on x2 -----------------
    a2 = subnet(x2, w2_ref, b2_ref, c2, 2 * c1)
    s2 = [CLAMP * jnp.tanh(a2[i]) for i in range(c1)]          # EUP tanh, f32
    y1 = [jnp.exp(s2[i]) * x1[i] + a2[c1 + i] for i in range(c1)]

    # ---- _coupling2: affine-transform x2 conditioned on y1 -----------------
    a1 = subnet(y1, w1_ref, b1_ref, c1, 2 * c2)
    s1 = [CLAMP * jnp.tanh(a1[i]) for i in range(c2)]
    y2 = [jnp.exp(s1[i]) * x2[i] + a1[c2 + i] for i in range(c2)]

    # One full, unmasked store per output-channel plane (no tile overlap / RMW
    # between the y1 and y2 halves).
    for i in range(c1):
        y_ref[i] = y1[i].astype(y_ref.dtype)
    for i in range(c2):
        y_ref[c1 + i] = y2[i].astype(y_ref.dtype)

    # Per-sample log-det.  Elementwise plane-sum is free VPU filler under the
    # EUP/HBM bound; one scalar reduction per sample lands in SMEM.
    s_tot = s2[0]
    for p in s2[1:] + s1:
        s_tot = s_tot + p
    for b in range(B):
        jac_ref[b] = jnp.sum(s_tot[b * rpb:(b + 1) * rpb, :])


def prepare_params(params):
    """Hoisted once (params are static): transpose/flatten/cast subnet params."""
    w2, b2, w1, b1 = params
    w2f = jnp.transpose(w2).reshape(-1).astype(jnp.float32)  # (2*c1*c2,), [o*c2+k]
    b2f = b2.reshape(-1).astype(jnp.float32)                  # (2*c1,)
    w1f = jnp.transpose(w1).reshape(-1).astype(jnp.float32)  # (2*c2*c1,), [o*c1+k]
    b1f = b1.reshape(-1).astype(jnp.float32)                  # (2*c2,)
    return w2f, b2f, w1f, b1f


def coupling_block_forward(x, c_list, prepared_params):
    """Equivalent of _BaseCouplingBlock.forward(x=[x], c=c_list, rev=False)."""
    B, C, H, W = x.shape
    HW = H * W
    assert HW % LANE == 0, "spatial size must be a multiple of 128 (see TODO)"
    R = (B * HW) // LANE

    # Reference forward reads a scalar from the condition tensor.
    s = c_list[0][0, 0, 0, 0]
    del s  # not consumed by the (unconditional) GLOW-affine subnets used here

    # NCHW -> channel-major lane-dense planes (C, B*HW/128, 128).
    # (Layout plumbing in the wrapper so every kernel op/store is lane-dense.)
    x_cm = jnp.transpose(x.reshape(B, C, HW), (1, 0, 2)).reshape(C, R, LANE)

    w2f, b2f, w1f, b1f = prepared_params

    y_cm, jac = pl.pallas_call(
        _coupling_kernel,
        out_shape=(
            jax.ShapeDtypeStruct((C, R, LANE), x.dtype),
            jax.ShapeDtypeStruct((B,), jnp.float32),
        ),
        in_specs=[
            pl.BlockSpec(memory_space=pltpu.MemorySpace.VMEM),   # x planes
            pl.BlockSpec(memory_space=pltpu.MemorySpace.SMEM),   # w2 (flat)
            pl.BlockSpec(memory_space=pltpu.MemorySpace.SMEM),   # b2
            pl.BlockSpec(memory_space=pltpu.MemorySpace.SMEM),   # w1 (flat)
            pl.BlockSpec(memory_space=pltpu.MemorySpace.SMEM),   # b1
        ],
        out_specs=(
            pl.BlockSpec(memory_space=pltpu.MemorySpace.VMEM),   # y planes
            pl.BlockSpec(memory_space=pltpu.MemorySpace.SMEM),   # per-sample logdet
        ),
    )(x_cm, w2f, b2f, w1f, b1f)

    # Channel-major planes -> NCHW.
    y = jnp.transpose(y_cm.reshape(C, B, HW), (1, 0, 2)).reshape(B, C, H, W)
    return (y,), jac


def reference_forward(x, params):
    """Pure-JAX NCHW reference for correctness checking."""
    B, C, H, W = x.shape
    c1 = C // 2
    w2, b2, w1, b1 = params
    x1, x2 = x[:, :c1], x[:, c1:]

    def conv1x1(inp, w, b):
        return jnp.einsum('bihw,io->bohw', inp, w) + b.reshape(1, -1, 1, 1)

    a2 = conv1x1(x2, w2, b2)
    s2 = CLAMP * jnp.tanh(a2[:, :c1])
    t2 = a2[:, c1:]
    y1 = jnp.exp(s2) * x1 + t2
    j1 = jnp.sum(s2, axis=(1, 2, 3))

    a1 = conv1x1(y1, w1, b1)
    s1 = CLAMP * jnp.tanh(a1[:, :C - c1])
    t1 = a1[:, C - c1:]
    y2 = jnp.exp(s1) * x2 + t1
    j2 = jnp.sum(s1, axis=(1, 2, 3))
    return jnp.concatenate([y1, y2], axis=1), j1 + j2


if __name__ == "__main__":
    key = jax.random.PRNGKey(0)
    kx, kc, k1, k2, k3, k4 = jax.random.split(key, 6)

    B, C, H, W = 2, 4, 16, 16
    c1 = C // 2
    c2 = C - c1

    x = jax.random.normal(kx, (B, C, H, W), jnp.float32)
    cond = jax.random.normal(kc, (B, 1, H, W), jnp.float32)  # only used for `s`

    # Deterministic 1x1-conv coupling subnet parameters; small scale so exp(s)
    # stays well-conditioned.
    w2 = 0.1 * jax.random.normal(k1, (c2, 2 * c1), jnp.float32)
    b2 = 0.1 * jax.random.normal(k2, (1, 2 * c1), jnp.float32)
    w1 = 0.1 * jax.random.normal(k3, (c1, 2 * c2), jnp.float32)
    b1 = 0.1 * jax.random.normal(k4, (1, 2 * c2), jnp.float32)
    params = (w2, b2, w1, b1)

    prepared = prepare_params(params)          # hoisted once (static params)

    (y,), jac = coupling_block_forward(x, [cond], prepared)
    jax.block_until_ready((y, jac))

    y_ref, jac_ref = reference_forward(x, params)
    assert y.shape == (B, C, H, W) and jac.shape == (B,)
    assert jnp.allclose(y, y_ref, rtol=1e-4, atol=1e-5)
    assert jnp.allclose(jac, jac_ref, rtol=1e-4, atol=1e-4)
    print("KERNEL_OK")
</pallas_src>

<mosaic_0001>
module attributes {stable_mosaic.version = 11 : i64} {
  func.func @_coupling_kernel(%arg0: memref<4x4x128xf32, #tpu.memory_space<vmem>>, %arg1: memref<8xf32, #tpu.memory_space<smem>>, %arg2: memref<4xf32, #tpu.memory_space<smem>>, %arg3: memref<8xf32, #tpu.memory_space<smem>>, %arg4: memref<4xf32, #tpu.memory_space<smem>>, %arg5: memref<4x4x128xf32, #tpu.memory_space<vmem>>, %arg6: memref<2xf32, #tpu.memory_space<smem>>) attributes {dimension_semantics = [], scalar_prefetch = 0 : i64, scratch_operands = 0 : i64, tpu.core_type = #tpu.core_type<tc>} {
    %c0 = arith.constant 0 : index
    %c0_0 = arith.constant 0 : index
    %c0_1 = arith.constant 0 : index
    %0 = vector.load %arg0[%c0, %c0_0, %c0_1] : memref<4x4x128xf32, #tpu.memory_space<vmem>>, vector<1x4x128xf32>
    %1 = vector.shape_cast %0 : vector<1x4x128xf32> to vector<4x128xf32>
    %c1 = arith.constant 1 : index
    %c0_2 = arith.constant 0 : index
    %c0_3 = arith.constant 0 : index
    %2 = vector.load %arg0[%c1, %c0_2, %c0_3] : memref<4x4x128xf32, #tpu.memory_space<vmem>>, vector<1x4x128xf32>
    %3 = vector.shape_cast %2 : vector<1x4x128xf32> to vector<4x128xf32>
    %c2 = arith.constant 2 : index
    %c0_4 = arith.constant 0 : index
    %c0_5 = arith.constant 0 : index
    %4 = vector.load %arg0[%c2, %c0_4, %c0_5] : memref<4x4x128xf32, #tpu.memory_space<vmem>>, vector<1x4x128xf32>
    %5 = vector.shape_cast %4 : vector<1x4x128xf32> to vector<4x128xf32>
    %c3 = arith.constant 3 : index
    %c0_6 = arith.constant 0 : index
    %c0_7 = arith.constant 0 : index
    %6 = vector.load %arg0[%c3, %c0_6, %c0_7] : memref<4x4x128xf32, #tpu.memory_space<vmem>>, vector<1x4x128xf32>
    %7 = vector.shape_cast %6 : vector<1x4x128xf32> to vector<4x128xf32>
    %c0_8 = arith.constant 0 : index
    %8 = memref.load %arg1[%c0_8] : memref<8xf32, #tpu.memory_space<smem>>
    %9 = vector.broadcast %8 : f32 to vector<4x128xf32>
    %10 = arith.mulf %5, %9 : vector<4x128xf32>
    %c1_9 = arith.constant 1 : index
    %11 = memref.load %arg1[%c1_9] : memref<8xf32, #tpu.memory_space<smem>>
    %12 = vector.broadcast %11 : f32 to vector<4x128xf32>
    %13 = arith.mulf %7, %12 : vector<4x128xf32>
    %14 = arith.addf %10, %13 : vector<4x128xf32>
    %c0_10 = arith.constant 0 : index
    %15 = memref.load %arg2[%c0_10] : memref<4xf32, #tpu.memory_space<smem>>
    %16 = vector.broadcast %15 : f32 to vector<4x128xf32>
    %17 = arith.addf %14, %16 : vector<4x128xf32>
    %c2_11 = arith.constant 2 : index
    %18 = memref.load %arg1[%c2_11] : memref<8xf32, #tpu.memory_space<smem>>
    %19 = vector.broadcast %18 : f32 to vector<4x128xf32>
    %20 = arith.mulf %5, %19 : vector<4x128xf32>
    %c3_12 = arith.constant 3 : index
    %21 = memref.load %arg1[%c3_12] : memref<8xf32, #tpu.memory_space<smem>>
    %22 = vector.broadcast %21 : f32 to vector<4x128xf32>
    %23 = arith.mulf %7, %22 : vector<4x128xf32>
    %24 = arith.addf %20, %23 : vector<4x128xf32>
    %c1_13 = arith.constant 1 : index
    %25 = memref.load %arg2[%c1_13] : memref<4xf32, #tpu.memory_space<smem>>
    %26 = vector.broadcast %25 : f32 to vector<4x128xf32>
    %27 = arith.addf %24, %26 : vector<4x128xf32>
    %c4 = arith.constant 4 : index
    %28 = memref.load %arg1[%c4] : memref<8xf32, #tpu.memory_space<smem>>
    %29 = vector.broadcast %28 : f32 to vector<4x128xf32>
    %30 = arith.mulf %5, %29 : vector<4x128xf32>
    %c5 = arith.constant 5 : index
    %31 = memref.load %arg1[%c5] : memref<8xf32, #tpu.memory_space<smem>>
    %32 = vector.broadcast %31 : f32 to vector<4x128xf32>
    %33 = arith.mulf %7, %32 : vector<4x128xf32>
    %34 = arith.addf %30, %33 : vector<4x128xf32>
    %c2_14 = arith.constant 2 : index
    %35 = memref.load %arg2[%c2_14] : memref<4xf32, #tpu.memory_space<smem>>
    %36 = vector.broadcast %35 : f32 to vector<4x128xf32>
    %37 = arith.addf %34, %36 : vector<4x128xf32>
    %c6 = arith.constant 6 : index
    %38 = memref.load %arg1[%c6] : memref<8xf32, #tpu.memory_space<smem>>
    %39 = vector.broadcast %38 : f32 to vector<4x128xf32>
    %40 = arith.mulf %5, %39 : vector<4x128xf32>
    %c7 = arith.constant 7 : index
    %41 = memref.load %arg1[%c7] : memref<8xf32, #tpu.memory_space<smem>>
    %42 = vector.broadcast %41 : f32 to vector<4x128xf32>
    %43 = arith.mulf %7, %42 : vector<4x128xf32>
    %44 = arith.addf %40, %43 : vector<4x128xf32>
    %c3_15 = arith.constant 3 : index
    %45 = memref.load %arg2[%c3_15] : memref<4xf32, #tpu.memory_space<smem>>
    %46 = vector.broadcast %45 : f32 to vector<4x128xf32>
    %47 = arith.addf %44, %46 : vector<4x128xf32>
    %48 = math.tanh %17 : vector<4x128xf32>
    %cst = arith.constant 2.000000e+00 : f32
    %49 = vector.broadcast %cst : f32 to vector<4x128xf32>
    %50 = arith.mulf %49, %48 : vector<4x128xf32>
    %51 = math.tanh %27 : vector<4x128xf32>
    %cst_16 = arith.constant 2.000000e+00 : f32
    %52 = vector.broadcast %cst_16 : f32 to vector<4x128xf32>
    %53 = arith.mulf %52, %51 : vector<4x128xf32>
    %54 = math.exp %50 : vector<4x128xf32>
    %55 = arith.mulf %54, %1 : vector<4x128xf32>
    %56 = arith.addf %55, %37 : vector<4x128xf32>
    %57 = math.exp %53 : vector<4x128xf32>
    %58 = arith.mulf %57, %3 : vector<4x128xf32>
    %59 = arith.addf %58, %47 : vector<4x128xf32>
    %c0_17 = arith.constant 0 : index
    %60 = memref.load %arg3[%c0_17] : memref<8xf32, #tpu.memory_space<smem>>
    %61 = vector.broadcast %60 : f32 to vector<4x128xf32>
    %62 = arith.mulf %56, %61 : vector<4x128xf32>
    %c1_18 = arith.constant 1 : index
    %63 = memref.load %arg3[%c1_18] : memref<8xf32, #tpu.memory_space<smem>>
    %64 = vector.broadcast %63 : f32 to vector<4x128xf32>
    %65 = arith.mulf %59, %64 : vector<4x128xf32>
    %66 = arith.addf %62, %65 : vector<4x128xf32>
    %c0_19 = arith.constant 0 : index
    %67 = memref.load %arg4[%c0_19] : memref<4xf32, #tpu.memory_space<smem>>
    %68 = vector.broadcast %67 : f32 to vector<4x128xf32>
    %69 = arith.addf %66, %68 : vector<4x128xf32>
    %c2_20 = arith.constant 2 : index
    %70 = memref.load %arg3[%c2_20] : memref<8xf32, #tpu.memory_space<smem>>
    %71 = vector.broadcast %70 : f32 to vector<4x128xf32>
    %72 = arith.mulf %56, %71 : vector<4x128xf32>
    %c3_21 = arith.constant 3 : index
    %73 = memref.load %arg3[%c3_21] : memref<8xf32, #tpu.memory_space<smem>>
    %74 = vector.broadcast %73 : f32 to vector<4x128xf32>
    %75 = arith.mulf %59, %74 : vector<4x128xf32>
    %76 = arith.addf %72, %75 : vector<4x128xf32>
    %c1_22 = arith.constant 1 : index
    %77 = memref.load %arg4[%c1_22] : memref<4xf32, #tpu.memory_space<smem>>
    %78 = vector.broadcast %77 : f32 to vector<4x128xf32>
    %79 = arith.addf %76, %78 : vector<4x128xf32>
    %c4_23 = arith.constant 4 : index
    %80 = memref.load %arg3[%c4_23] : memref<8xf32, #tpu.memory_space<smem>>
    %81 = vector.broadcast %80 : f32 to vector<4x128xf32>
    %82 = arith.mulf %56, %81 : vector<4x128xf32>
    %c5_24 = arith.constant 5 : index
    %83 = memref.load %arg3[%c5_24] : memref<8xf32, #tpu.memory_space<smem>>
    %84 = vector.broadcast %83 : f32 to vector<4x128xf32>
    %85 = arith.mulf %59, %84 : vector<4x128xf32>
    %86 = arith.addf %82, %85 : vector<4x128xf32>
    %c2_25 = arith.constant 2 : index
    %87 = memref.load %arg4[%c2_25] : memref<4xf32, #tpu.memory_space<smem>>
    %88 = vector.broadcast %87 : f32 to vector<4x128xf32>
    %89 = arith.addf %86, %88 : vector<4x128xf32>
    %c6_26 = arith.constant 6 : index
    %90 = memref.load %arg3[%c6_26] : memref<8xf32, #tpu.memory_space<smem>>
    %91 = vector.broadcast %90 : f32 to vector<4x128xf32>
    %92 = arith.mulf %56, %91 : vector<4x128xf32>
    %c7_27 = arith.constant 7 : index
    %93 = memref.load %arg3[%c7_27] : memref<8xf32, #tpu.memory_space<smem>>
    %94 = vector.broadcast %93 : f32 to vector<4x128xf32>
    %95 = arith.mulf %59, %94 : vector<4x128xf32>
    %96 = arith.addf %92, %95 : vector<4x128xf32>
    %c3_28 = arith.constant 3 : index
    %97 = memref.load %arg4[%c3_28] : memref<4xf32, #tpu.memory_space<smem>>
    %98 = vector.broadcast %97 : f32 to vector<4x128xf32>
    %99 = arith.addf %96, %98 : vector<4x128xf32>
    %100 = math.tanh %69 : vector<4x128xf32>
    %cst_29 = arith.constant 2.000000e+00 : f32
    %101 = vector.broadcast %cst_29 : f32 to vector<4x128xf32>
    %102 = arith.mulf %101, %100 : vector<4x128xf32>
    %103 = math.tanh %79 : vector<4x128xf32>
    %cst_30 = arith.constant 2.000000e+00 : f32
    %104 = vector.broadcast %cst_30 : f32 to vector<4x128xf32>
    %105 = arith.mulf %104, %103 : vector<4x128xf32>
    %106 = math.exp %102 : vector<4x128xf32>
    %107 = arith.mulf %106, %5 : vector<4x128xf32>
    %108 = arith.addf %107, %89 : vector<4x128xf32>
    %109 = math.exp %105 : vector<4x128xf32>
    %110 = arith.mulf %109, %7 : vector<4x128xf32>
    %111 = arith.addf %110, %99 : vector<4x128xf32>
    %c0_31 = arith.constant 0 : index
    %c0_32 = arith.constant 0 : index
    %c0_33 = arith.constant 0 : index
    %112 = vector.load %arg5[%c0_31, %c0_32, %c0_33] : memref<4x4x128xf32, #tpu.memory_space<vmem>>, vector<1x4x128xf32>
    %113 = vector.shape_cast %112 : vector<1x4x128xf32> to vector<4x128xf32>
    %114 = vector.shape_cast %56 : vector<4x128xf32> to vector<1x4x128xf32>
    tpu.vector_store %arg5[%c0_31, %c0_32, %c0_33], %114 {strides = array<i32>} : memref<4x4x128xf32, #tpu.memory_space<vmem>>, vector<1x4x128xf32>,
    %c1_34 = arith.constant 1 : index
    %c0_35 = arith.constant 0 : index
    %c0_36 = arith.constant 0 : index
    %115 = vector.load %arg5[%c1_34, %c0_35, %c0_36] : memref<4x4x128xf32, #tpu.memory_space<vmem>>, vector<1x4x128xf32>
    %116 = vector.shape_cast %115 : vector<1x4x128xf32> to vector<4x128xf32>
    %117 = vector.shape_cast %59 : vector<4x128xf32> to vector<1x4x128xf32>
    tpu.vector_store %arg5[%c1_34, %c0_35, %c0_36], %117 {strides = array<i32>} : memref<4x4x128xf32, #tpu.memory_space<vmem>>, vector<1x4x128xf32>,
    %c2_37 = arith.constant 2 : index
    %c0_38 = arith.constant 0 : index
    %c0_39 = arith.constant 0 : index
    %118 = vector.load %arg5[%c2_37, %c0_38, %c0_39] : memref<4x4x128xf32, #tpu.memory_space<vmem>>, vector<1x4x128xf32>
    %119 = vector.shape_cast %118 : vector<1x4x128xf32> to vector<4x128xf32>
    %120 = vector.shape_cast %108 : vector<4x128xf32> to vector<1x4x128xf32>
    tpu.vector_store %arg5[%c2_37, %c0_38, %c0_39], %120 {strides = array<i32>} : memref<4x4x128xf32, #tpu.memory_space<vmem>>, vector<1x4x128xf32>,
    %c3_40 = arith.constant 3 : index
    %c0_41 = arith.constant 0 : index
    %c0_42 = arith.constant 0 : index
    %121 = vector.load %arg5[%c3_40, %c0_41, %c0_42] : memref<4x4x128xf32, #tpu.memory_space<vmem>>, vector<1x4x128xf32>
    %122 = vector.shape_cast %121 : vector<1x4x128xf32> to vector<4x128xf32>
    %123 = vector.shape_cast %111 : vector<4x128xf32> to vector<1x4x128xf32>
    tpu.vector_store %arg5[%c3_40, %c0_41, %c0_42], %123 {strides = array<i32>} : memref<4x4x128xf32, #tpu.memory_space<vmem>>, vector<1x4x128xf32>,
    %124 = arith.addf %50, %53 : vector<4x128xf32>
    %125 = arith.addf %124, %102 : vector<4x128xf32>
    %126 = arith.addf %125, %105 : vector<4x128xf32>
    %127 = vector.extract_strided_slice %126 {offsets = [0, 0], sizes = [2, 128], strides = [1, 1]} : vector<4x128xf32> to vector<2x128xf32>
    %128 = vector.shape_cast %127 : vector<2x128xf32> to vector<1x2x128xf32>
    %cst_43 = arith.constant dense<0.000000e+00> : vector<1xf32>
    %129 = vector.multi_reduction <add>, %128, %cst_43 [1, 2] : vector<1x2x128xf32> to vector<1xf32>
    %130 = vector.shape_cast %129 : vector<1xf32> to vector<1x1x1xf32>
    %131 = vector.extract %130[0, 0, 0] : f32 from vector<1x1x1xf32>
    %c0_44 = arith.constant 0 : index
    %132 = memref.load %arg6[%c0_44] : memref<2xf32, #tpu.memory_space<smem>>
    memref.store %131, %arg6[%c0_44] : memref<2xf32, #tpu.memory_space<smem>>
    %133 = vector.extract_strided_slice %126 {offsets = [2, 0], sizes = [2, 128], strides = [1, 1]} : vector<4x128xf32> to vector<2x128xf32>
    %134 = vector.shape_cast %133 : vector<2x128xf32> to vector<1x2x128xf32>
    %cst_45 = arith.constant dense<0.000000e+00> : vector<1xf32>
    %135 = vector.multi_reduction <add>, %134, %cst_45 [1, 2] : vector<1x2x128xf32> to vector<1xf32>
    %136 = vector.shape_cast %135 : vector<1xf32> to vector<1x1x1xf32>
    %137 = vector.extract %136[0, 0, 0] : f32 from vector<1x1x1xf32>
    %c1_46 = arith.constant 1 : index
    %138 = memref.load %arg6[%c1_46] : memref<2xf32, #tpu.memory_space<smem>>
    memref.store %137, %arg6[%c1_46] : memref<2xf32, #tpu.memory_space<smem>>
    return
  }
}

</mosaic_0001>

<llo_original>
// kernel: tpu_custom_call.1
$region0: #{tpu_custom_call.1}
  #allocation0 [shape = 'u32[]', space=smem, size = 0x4, offset = 0x4, fixed_abs, tag = 'smem constant byte address 0x4 - core index']
  #allocation1 [shape = 'u32[144,128]{1,0:T(1,128)}', space=vmem, size = 0x12000, scoped, tag = 'internal scratch']
  %s0 = inlined_call_operand.hbm [shape: f32[4,4,128], index: 0, kind: input, shape index: {}]
  %s1 = inlined_call_operand.vmem [shape: f32[8], index: 1, kind: input, shape index: {}]
  %s2 = inlined_call_operand.vmem [shape: f32[4], index: 2, kind: input, shape index: {}]
  %s3 = inlined_call_operand.vmem [shape: f32[8], index: 3, kind: input, shape index: {}]
  %s4 = inlined_call_operand.vmem [shape: f32[4], index: 4, kind: input, shape index: {}]
  %s5 = inlined_call_operand.hbm [shape: f32[4,4,128], index: 5, kind: output, shape index: {0}]
  %s6 = inlined_call_operand.hbm [shape: f32[2], index: 6, kind: output, shape index: {1}]
  %7 = xla_tuple %s5, %s6
  %s8 = sld [smem:[#allocation0]]
  $region58: #{tpu_custom_call.1} parent=0
    _
  %s10 = ssub.s32 1, %s8
  %s11 = scalar_select 0, %s10, %s8
  $region1: #{tpu_custom_call.1} parent=0
    #allocation2 [shape = 'u8[8192]{0}', space=vmem, size = 0x2000, scoped, tag = 'input window, operand 0, single buffered']
    #allocation3 [shape = 's32[1]{0}', space=sflag, size = 0x4, scoped, tag = 'scoped memory for tpu_custom_call.1']
    #allocation4 [shape = 's32[1]{0}', space=sflag, size = 0x4, scoped, tag = 'scoped memory for tpu_custom_call.1']
    #allocation5 [shape = 's32[1]{0}', space=sflag, size = 0x4, scoped, tag = 'scoped memory for tpu_custom_call.1']
    #allocation6 [shape = 's32[1]{0}', space=sflag, size = 0x4, scoped, tag = 'scoped memory for tpu_custom_call.1']
    #allocation7 [shape = 'u8[512]{0}', space=smem, size = 0x200, scoped, tag = 'input window, operand 1, single buffered']
    #allocation8 [shape = 'u8[512]{0}', space=smem, size = 0x200, scoped, tag = 'input window, operand 2, single buffered']
    #allocation9 [shape = 's32[1]{0}', space=sflag, size = 0x4, scoped, tag = 'scoped memory for tpu_custom_call.1']
    #allocation10 [shape = 'u8[512]{0}', space=smem, size = 0x200, scoped, tag = 'input window, operand 3, single buffered']
    #allocation11 [shape = 'u8[512]{0}', space=smem, size = 0x200, scoped, tag = 'input window, operand 4, single buffered']
    #allocation12 [shape = 's32[1]{0}', space=sflag, size = 0x4, scoped, tag = 'scoped memory for tpu_custom_call.1']
    #allocation13 [shape = 'u8[8192]{0}', space=vmem, size = 0x2000, scoped, tag = 'output window, operand 0, single buffered']
    #allocation14 [shape = 'u8[512]{0}', space=smem, size = 0x200, scoped, tag = 'output window, operand 1, single buffered']
    %12 = vsyncpa [#allocation3], 0
    %13 = vsyncpa [#allocation6], 0
    %14 = vsyncpa [#allocation9], 0
    %15 = vsyncpa [#allocation12], 0
    %16 = vsyncpa [#allocation4], 0
    %17 = vsyncpa [#allocation5], 0
    // Predicated region
    $region2: #{tpu_custom_call.1} parent=1 // pred_check
      _
    $region3: #{tpu_custom_call.1} parent=1 // pred_check_branch
      %19 = sbr.rel (0) target = $region5
    $region4: #{tpu_custom_call.1} parent=1 // pred_region
      %s21 = ssub.s32 256, 256
      %22 = vsyncadd [#allocation3], %s21
      %s23 = sshll.u32 [#allocation2], 4
      %s24 = int_to_ptr.vmem [resolvable:$true] %s23
      %29 = dma.hbm_to_vmem [thread:$0]  %s0, 256, %s24, [#allocation3], 64, 64, 4
    $region5: #{tpu_custom_call.1} parent=1 // pred_fallthru
      _
    // Predicated region
    $region6: #{tpu_custom_call.1} parent=1 // pred_check
      _
    $region7: #{tpu_custom_call.1} parent=1 // pred_check_branch
      %31 = sbr.rel (0) target = $region9
    $region8: #{tpu_custom_call.1} parent=1 // pred_region
      %s33 = ssub.s32 16, 16
      %34 = vsyncadd [#allocation6], %s33
      %s36 = sshll.u32 %s1, 4
      %s37 = int_to_ptr.vmem [resolvable:$true] %s36
      %39 = dma.vmem_to_smem %s37, 16, [#allocation7], [#allocation6]
    $region9: #{tpu_custom_call.1} parent=1 // pred_fallthru
      _
    // Predicated region
    $region10: #{tpu_custom_call.1} parent=1 // pred_check
      _
    $region11: #{tpu_custom_call.1} parent=1 // pred_check_branch
      %41 = sbr.rel (0) target = $region13
    $region12: #{tpu_custom_call.1} parent=1 // pred_region
      %s43 = ssub.s32 16, 16
      %44 = vsyncadd [#allocation9], %s43
      %s46 = sshll.u32 %s2, 4
      %s47 = int_to_ptr.vmem [resolvable:$true] %s46
      %49 = dma.vmem_to_smem %s47, 16, [#allocation8], [#allocation9]
    $region13: #{tpu_custom_call.1} parent=1 // pred_fallthru
      _
    // Predicated region
    $region14: #{tpu_custom_call.1} parent=1 // pred_check
      _
    $region15: #{tpu_custom_call.1} parent=1 // pred_check_branch
      %51 = sbr.rel (0) target = $region17
    $region16: #{tpu_custom_call.1} parent=1 // pred_region
      %s53 = ssub.s32 16, 16
      %54 = vsyncadd [#allocation9], %s53
      %s56 = sshll.u32 %s3, 4
      %s57 = int_to_ptr.vmem [resolvable:$true] %s56
      %59 = dma.vmem_to_smem %s57, 16, [#allocation10], [#allocation9]
    $region17: #{tpu_custom_call.1} parent=1 // pred_fallthru
      _
    // Predicated region
    $region18: #{tpu_custom_call.1} parent=1 // pred_check
      _
    $region19: #{tpu_custom_call.1} parent=1 // pred_check_branch
      %61 = sbr.rel (0) target = $region21
    $region20: #{tpu_custom_call.1} parent=1 // pred_region
      %s63 = ssub.s32 16, 16
      %64 = vsyncadd [#allocation12], %s63
      %s66 = sshll.u32 %s4, 4
      %s67 = int_to_ptr.vmem [resolvable:$true] %s66
      %69 = dma.vmem_to_smem %s67, 16, [#allocation11], [#allocation12]
    $region21: #{tpu_custom_call.1} parent=1 // pred_fallthru
      _
    // Predicated region
    $region22: #{tpu_custom_call.1} parent=1 // pred_check
      _
    $region23: #{tpu_custom_call.1} parent=1 // pred_check_branch
      %71 = sbr.rel (0) target = $region25
    $region24: #{tpu_custom_call.1} parent=1 // pred_region
      %72 = dma.done [#allocation3], 256
    $region25: #{tpu_custom_call.1} parent=1 // pred_fallthru
      _
    // Predicated region
    $region26: #{tpu_custom_call.1} parent=1 // pred_check
      _
    $region27: #{tpu_custom_call.1} parent=1 // pred_check_branch
      %74 = sbr.rel (0) target = $region29
    $region28: #{tpu_custom_call.1} parent=1 // pred_region
      %75 = dma.done [#allocation6], 16
    $region29: #{tpu_custom_call.1} parent=1 // pred_fallthru
      _
    // Predicated region
    $region30: #{tpu_custom_call.1} parent=1 // pred_check
      _
    $region31: #{tpu_custom_call.1} parent=1 // pred_check_branch
      %77 = sbr.rel (0) target = $region33
    $region32: #{tpu_custom_call.1} parent=1 // pred_region
      %78 = dma.done [#allocation9], 16
    $region33: #{tpu_custom_call.1} parent=1 // pred_fallthru
      _
    // Predicated region
    $region34: #{tpu_custom_call.1} parent=1 // pred_check
      _
    $region35: #{tpu_custom_call.1} parent=1 // pred_check_branch
      %80 = sbr.rel (0) target = $region37
    $region36: #{tpu_custom_call.1} parent=1 // pred_region
      %81 = dma.done [#allocation9], 16
    $region37: #{tpu_custom_call.1} parent=1 // pred_fallthru
      _
    // Predicated region
    $region38: #{tpu_custom_call.1} parent=1 // pred_check
      _
    $region39: #{tpu_custom_call.1} parent=1 // pred_check_branch
      %83 = sbr.rel (0) target = $region41
    $region40: #{tpu_custom_call.1} parent=1 // pred_region
      %84 = dma.done [#allocation12], 16
    $region41: #{tpu_custom_call.1} parent=1 // pred_fallthru
      _
    %85 = sfence
    %v86 = vld [vmem:[#allocation2] sm:$0xf]
    %s87 = scalar_lea.vmem [#allocation2], 4
    %v88 = vld [vmem:[%s87] sm:$0xf]
    %s89 = scalar_lea.vmem [#allocation2], 8
    %v90 = vld [vmem:[%s89] sm:$0xf]
    %s91 = scalar_lea.vmem [#allocation2], 12
    %v92 = vld [vmem:[%s91] sm:$0xf]
    %s93 = sld [smem:[#allocation7]]
    %v94 = vstv %s93
    %v95 = vmul.f32 %v90, %v94
    %s96 = sld [smem:[#allocation7 + $0x1]]
    %v97 = vstv %s96
    %v98 = vmul.f32 %v92, %v97
    %v99 = vadd.f32 %v95, %v98
    %s100 = sld [smem:[#allocation8]]
    %v101 = vstv %s100
    %v102 = vadd.f32 %v99, %v101
    %s103 = sld [smem:[#allocation7 + $0x2]]
    %v104 = vstv %s103
    %v105 = vmul.f32 %v90, %v104
    %s106 = sld [smem:[#allocation7 + $0x3]]
    %v107 = vstv %s106
    %v108 = vmul.f32 %v92, %v107
    %v109 = vadd.f32 %v105, %v108
    %s110 = sld [smem:[#allocation8 + $0x1]]
    %v111 = vstv %s110
    %v112 = vadd.f32 %v109, %v111
    %s113 = sld [smem:[#allocation7 + $0x4]]
    %v114 = vstv %s113
    %v115 = vmul.f32 %v90, %v114
    %s116 = sld [smem:[#allocation7 + $0x5]]
    %v117 = vstv %s116
    %v118 = vmul.f32 %v92, %v117
    %v119 = vadd.f32 %v115, %v118
    %s120 = sld [smem:[#allocation8 + $0x2]]
    %v121 = vstv %s120
    %v122 = vadd.f32 %v119, %v121
    %s123 = sld [smem:[#allocation7 + $0x6]]
    %v124 = vstv %s123
    %v125 = vmul.f32 %v90, %v124
    %s126 = sld [smem:[#allocation7 + $0x7]]
    %v127 = vstv %s126
    %v128 = vmul.f32 %v92, %v127
    %v129 = vadd.f32 %v125, %v128
    %s130 = sld [smem:[#allocation8 + $0x3]]
    %v131 = vstv %s130
    %v132 = vadd.f32 %v129, %v131
    %v133 = vtanh.pop %v102
    %v134 = vmul.f32 %v133, 2.0
    %v135 = vtanh.pop %v112
    %v136 = vmul.f32 %v135, 2.0
    %v137 = vmul.f32 %v134, 1.442695
    %v138 = vpow.pop %v137
    %v139 = vmul.f32 %v138, %v86
    %v140 = vadd.f32 %v139, %v122
    %v141 = vmul.f32 %v136, 1.442695
    %v142 = vpow.pop %v141
    %v143 = vmul.f32 %v142, %v88
    %v144 = vadd.f32 %v143, %v132
    %s145 = sld [smem:[#allocation10]]
    %v146 = vstv %s145
    %v147 = vmul.f32 %v140, %v146
    %s148 = sld [smem:[#allocation10 + $0x1]]
    %v149 = vstv %s148
    %v150 = vmul.f32 %v144, %v149
    %v151 = vadd.f32 %v147, %v150
    %s152 = sld [smem:[#allocation11]]
    %v153 = vstv %s152
    %v154 = vadd.f32 %v151, %v153
    %s155 = sld [smem:[#allocation10 + $0x2]]
    %v156 = vstv %s155
    %v157 = vmul.f32 %v140, %v156
    %s158 = sld [smem:[#allocation10 + $0x3]]
    %v159 = vstv %s158
    %v160 = vmul.f32 %v144, %v159
    %v161 = vadd.f32 %v157, %v160
    %s162 = sld [smem:[#allocation11 + $0x1]]
    %v163 = vstv %s162
    %v164 = vadd.f32 %v161, %v163
    %s165 = sld [smem:[#allocation10 + $0x4]]
    %v166 = vstv %s165
    %v167 = vmul.f32 %v140, %v166
    %s168 = sld [smem:[#allocation10 + $0x5]]
    %v169 = vstv %s168
    %v170 = vmul.f32 %v144, %v169
    %v171 = vadd.f32 %v167, %v170
    %s172 = sld [smem:[#allocation11 + $0x2]]
    %v173 = vstv %s172
    %v174 = vadd.f32 %v171, %v173
    %s175 = sld [smem:[#allocation10 + $0x6]]
    %v176 = vstv %s175
    %v177 = vmul.f32 %v140, %v176
    %s178 = sld [smem:[#allocation10 + $0x7]]
    %v179 = vstv %s178
    %v180 = vmul.f32 %v144, %v179
    %v181 = vadd.f32 %v177, %v180
    %s182 = sld [smem:[#allocation11 + $0x3]]
    %v183 = vstv %s182
    %v184 = vadd.f32 %v181, %v183
    %v185 = vtanh.pop %v154
    %v186 = vmul.f32 %v185, 2.0
    %v187 = vtanh.pop %v164
    %v188 = vmul.f32 %v187, 2.0
    %v189 = vmul.f32 %v186, 1.442695
    %v190 = vpow.pop %v189
    %v191 = vmul.f32 %v190, %v90
    %v192 = vadd.f32 %v191, %v174
    %v193 = vmul.f32 %v188, 1.442695
    %v194 = vpow.pop %v193
    %v195 = vmul.f32 %v194, %v92
    %v196 = vadd.f32 %v195, %v184
    %197 = vst [vmem:[#allocation13] sm:$0xf] %v140
    %s198 = scalar_lea.vmem [#allocation13], 4
    %199 = vst [vmem:[%s198] sm:$0xf] %v144
    %s200 = scalar_lea.vmem [#allocation13], 8
    %201 = vst [vmem:[%s200] sm:$0xf] %v192
    %s202 = scalar_lea.vmem [#allocation13], 12
    %203 = vst [vmem:[%s202] sm:$0xf] %v196
    %v204 = vadd.f32 %v134, %v136
    %v205 = vadd.f32 %v204, %v186
    %v206 = vadd.f32 %v205, %v188
    %vm207 = vcmask 1041408
    %v208 = vsel %vm207, %v206, 0.0
    %209 = vadd.xlane.f32.xlu0 %v208
    %v210 = vpop.xlane.xlu0 %209
    %v211 = vrot.slane %v210, 4
    %v212 = vadd.f32 %v210, %v211
    %v213 = vrot.slane %v212, 2
    %v214 = vadd.f32 %v212, %v213
    %v215 = vrot.slane %v214, 1
    %v216 = vadd.f32 %v214, %v215
    %s217 = vtos %v216
    %s218 = scalar_lea.smem [#allocation14], 0
    %219 = sst [smem:[%s218]] %s217
    %v221 = vrot.slane %v206, 2
    %v223 = vsel %vm207, %v221, 0.0
    %224 = vadd.xlane.f32.xlu0 %v223
    %v225 = vpop.xlane.xlu0 %224
    %v226 = vrot.slane %v225, 4
    %v227 = vadd.f32 %v225, %v226
    %v228 = vrot.slane %v227, 2
    %v229 = vadd.f32 %v227, %v228
    %v230 = vrot.slane %v229, 1
    %v231 = vadd.f32 %v229, %v230
    %s232 = vtos %v231
    %s233 = scalar_lea.smem [#allocation14], 1
    %234 = sst [smem:[%s233]] %s232
    // Predicated region
    $region42: #{tpu_custom_call.1} parent=1 // pred_check
      _
    $region43: #{tpu_custom_call.1} parent=1 // pred_check_branch
      %236 = sbr.rel (0) target = $region45
    $region44: #{tpu_custom_call.1} parent=1 // pred_region
      %s238 = ssub.s32 256, 256
      %239 = vsyncadd [#allocation4], %s238
      %s240 = sshll.u32 [#allocation13], 4
      %s241 = int_to_ptr.vmem [resolvable:$true] %s240
      %246 = dma.vmem_to_hbm [thread:$0]  %s241, 256, %s5, [#allocation4], 64, 64, 4
    $region45: #{tpu_custom_call.1} parent=1 // pred_fallthru
      _
    // Predicated region
    $region46: #{tpu_custom_call.1} parent=1 // pred_check
      _
    $region47: #{tpu_custom_call.1} parent=1 // pred_check_branch
      %248 = sbr.rel (0) target = $region49
    $region48: #{tpu_custom_call.1} parent=1 // pred_region
      %s250 = ssub.s32 16, 16
      %251 = vsyncadd [#allocation5], %s250
      %254 = dma.smem_to_hbm [#allocation14], 16, %s6, [#allocation5]
    $region49: #{tpu_custom_call.1} parent=1 // pred_fallthru
      _
    // Predicated region
    $region50: #{tpu_custom_call.1} parent=1 // pred_check
      _
    $region51: #{tpu_custom_call.1} parent=1 // pred_check_branch
      %256 = sbr.rel (0) target = $region53
    $region52: #{tpu_custom_call.1} parent=1 // pred_region
      %257 = dma.done [#allocation4], 256
    $region53: #{tpu_custom_call.1} parent=1 // pred_fallthru
      _
    // Predicated region
    $region54: #{tpu_custom_call.1} parent=1 // pred_check
      _
    $region55: #{tpu_custom_call.1} parent=1 // pred_check_branch
      %259 = sbr.rel (0) target = $region57
    $region56: #{tpu_custom_call.1} parent=1 // pred_region
      %260 = dma.done [#allocation5], 16
    $region57: #{tpu_custom_call.1} parent=1 // pred_fallthru
      _
    %261 = sfence
    %262 = vsyncpa [#allocation3], 1
    %263 = vsyncpa [#allocation4], 1
    %264 = vsyncpa [#allocation5], 1
    %265 = vsyncpa [#allocation6], 1
    %266 = vsyncpa [#allocation9], 1
    %267 = vsyncpa [#allocation12], 1

</llo_original>
